<compile_context>
chip_gen: v5e
topology: v5e:2x2
jax: 0.10.0
libtpu: 0.0.40
codegen_flags: <defaults>
</compile_context>

<pallas_src>
import functools

import jax
import jax.numpy as jnp
from jax import lax
from jax.experimental import pallas as pl
from jax.experimental.pallas import tpu as pltpu


_LANE = 128
_MAX_TK = 2048                       # upper bound on the K tile (128-multiple)
_INPUT_VMEM_BUDGET = 12 * 1024 * 1024  # budget for the streamed F slabs
_SMALL_M_LIMIT = 1024                # single-slab path: (M, M) f32 acc <= 4 MiB


def _round_up(x, m):
    return ((x + m - 1) // m) * m


def _pick_max_tk(rows_resident, itemsize, nbuf=3):
    """Largest K tile such that the resident F slab(s) fit the VMEM budget."""
    tk = _INPUT_VMEM_BUDGET // max(1, rows_resident * itemsize * nbuf)
    tk = (tk // _LANE) * _LANE
    return int(min(max(tk, _LANE), _MAX_TK))


def _choose_k_tiling(K, max_tk):
    """Pick (kp, tk) minimising K padding (review: avoid round_up(K, tk))."""
    if K <= max_tk:
        return K, K                         # single K step, zero padding
    kp = _round_up(K, _LANE)
    q = kp // _LANE
    best = 1
    for d in range(1, max_tk // _LANE + 1):  # largest 128-mult. divisor of kp
        if q % d == 0:
            best = d
    tk = _LANE * best
    if tk >= 512:
        return kp, tk
    # Degenerate divisor structure: accept a little padding for decent tiles.
    tk = min(max_tk, 1024)
    return _round_up(K, tk), tk


# ---------------------------------------------------------------------------
# Kernels
# ---------------------------------------------------------------------------
def _gram_slab_kernel(f_ref, g_ref, acc_ref, *, inv_norm, cast_bf16):
    """grid = (n_k_splits, k_steps_per_split). F is read from HBM once total.

    Axis 0 ("parallel") splits the K reduction across TensorCores (v7x);
    axis 1 ("arbitrary") is the per-core K loop into one f32 accumulator.
    """
    k = pl.program_id(1)

    @pl.when(k == 0)
    def _():
        acc_ref[...] = jnp.zeros_like(acc_ref)

    f = f_ref[...]
    if cast_bf16:
        f = f.astype(jnp.bfloat16)         # native MXU path, no extra HBM pass
    # Contract the lane (K) axis of both operands: no explicit transpose.
    acc_ref[...] += lax.dot_general(
        f, f, dimension_numbers=(((1,), (1,)), ((), ())),
        preferred_element_type=jnp.float32)

    @pl.when(k == pl.num_programs(1) - 1)
    def _():
        g_ref[...] = acc_ref[...] * inv_norm


def _gram_slab_mse_kernel(f_ref, t_ref, g_ref, loss_ref, acc_ref, *,
                          inv_norm, inv_count, cast_bf16):
    """Single-core variant with the MSE vs. target fused into the epilogue.

    grid = (k_steps,). Target gram has a constant block index -> fetched once
    and kept resident; the scalar reduction runs only once, in the last step.
    """
    k = pl.program_id(0)

    @pl.when(k == 0)
    def _():
        acc_ref[...] = jnp.zeros_like(acc_ref)

    f = f_ref[...]
    if cast_bf16:
        f = f.astype(jnp.bfloat16)
    acc_ref[...] += lax.dot_general(
        f, f, dimension_numbers=(((1,), (1,)), ((), ())),
        preferred_element_type=jnp.float32)

    @pl.when(k == pl.num_programs(0) - 1)
    def _():
        g = acc_ref[...] * inv_norm
        g_ref[...] = g
        d = g - t_ref[...]
        loss_ref[...] = jnp.sum(d * d, keepdims=True) * inv_count


def _gram_panel_kernel(fr_ref, fc_ref, g_ref, acc_ref, *, inv_norm, cast_bf16):
    """Fallback panel kernel for M > 1024: grid = (i, j, k)."""
    k = pl.program_id(2)

    @pl.when(k == 0)
    def _():
        acc_ref[...] = jnp.zeros_like(acc_ref)

    a = fr_ref[...]
    b = fc_ref[...]
    if cast_bf16:
        a = a.astype(jnp.bfloat16)
        b = b.astype(jnp.bfloat16)
    acc_ref[...] += lax.dot_general(
        a, b, dimension_numbers=(((1,), (1,)), ((), ())),
        preferred_element_type=jnp.float32)

    @pl.when(k == pl.num_programs(2) - 1)
    def _():
        g_ref[...] = acc_ref[...] * inv_norm


# ---------------------------------------------------------------------------
# Wrappers
# ---------------------------------------------------------------------------
def _f_block_spec(block_shape, index_map, k_steps):
    if k_steps >= 4:   # deep-buffer the streamed F slab when the K loop is long
        return pl.BlockSpec(block_shape, index_map, pipeline_mode=pl.Buffered(3))
    return pl.BlockSpec(block_shape, index_map)


def _gram_small(features, *, norm, target=None, use_bf16_mxu=True):
    """Single-slab gram for M <= 1024 (the StyleLoss regime). F read once."""
    M, K = features.shape
    itemsize = features.dtype.itemsize
    cast_bf16 = bool(use_bf16_mxu) and features.dtype == jnp.float32

    max_tk = _pick_max_tk(M, itemsize)
    kp, tk = _choose_k_tiling(K, max_tk)
    f = features
    if kp != K:
        # NOTE: this pad is a full extra HBM read+write of F; it only triggers
        # when H*W is not 128-aligned (review: keep padding a no-op otherwise).
        f = jnp.pad(f, ((0, 0), (0, kp - K)))
    k_steps = kp // tk

    inv_norm = 1.0 / float(norm)
    flops = 2 * M * M * kp

    # 2-way K split over a "parallel" leading axis: uses both v7x TensorCores
    # while still streaming F once; costs only an extra tiny (M, M) combine.
    n_splits = 2 if (k_steps >= 4 and k_steps % 2 == 0 and M >= 128) else 1

    if target is not None and n_splits == 1:
        inv_count = 1.0 / float(M * M)
        kernel = functools.partial(_gram_slab_mse_kernel, inv_norm=inv_norm,
                                   inv_count=inv_count, cast_bf16=cast_bf16)
        g, loss = pl.pallas_call(
            kernel,
            out_shape=(jax.ShapeDtypeStruct((M, M), jnp.float32),
                       jax.ShapeDtypeStruct((1, 1), jnp.float32)),
            grid_spec=pltpu.PrefetchScalarGridSpec(
                num_scalar_prefetch=0,
                grid=(k_steps,),
                in_specs=[
                    _f_block_spec((M, tk), lambda k: (0, k), k_steps),
                    pl.BlockSpec((M, M), lambda k: (0, 0)),   # resident target
                ],
                out_specs=[
                    pl.BlockSpec((M, M), lambda k: (0, 0)),
                    pl.BlockSpec((1, 1), lambda k: (0, 0)),
                ],
                scratch_shapes=[pltpu.VMEM((M, M), jnp.float32)]),
            compiler_params=pltpu.CompilerParams(
                dimension_semantics=("arbitrary",)),
            cost_estimate=pl.CostEstimate(
                flops=flops, transcendentals=0,
                bytes_accessed=M * kp * itemsize + 3 * M * M * 4),
        )(f, target.astype(jnp.float32))
        return g, loss[0, 0]

    k_per_split = k_steps // n_splits
    kernel = functools.partial(_gram_slab_kernel, inv_norm=inv_norm,
                               cast_bf16=cast_bf16)
    partial_g = pl.pallas_call(
        kernel,
        out_shape=jax.ShapeDtypeStruct((n_splits, M, M), jnp.float32),
        grid_spec=pltpu.PrefetchScalarGridSpec(
            num_scalar_prefetch=0,
            grid=(n_splits, k_per_split),
            in_specs=[
                _f_block_spec((M, tk),
                              lambda c, k: (0, c * k_per_split + k),
                              k_per_split),
            ],
            out_specs=pl.BlockSpec((None, M, M), lambda c, k: (c, 0, 0)),
            scratch_shapes=[pltpu.VMEM((M, M), jnp.float32)]),
        compiler_params=pltpu.CompilerParams(
            dimension_semantics=("parallel", "arbitrary")),
        cost_estimate=pl.CostEstimate(
            flops=flops, transcendentals=0,
            bytes_accessed=M * kp * itemsize + n_splits * M * M * 4),
    )(f)
    g = partial_g[0] if n_splits == 1 else jnp.sum(partial_g, axis=0)

    if target is None:
        return g
    # O(M^2) tail only; review-sanctioned plain-XLA MSE for the split path.
    loss = jnp.mean((g - target.astype(jnp.float32)) ** 2)
    return g, loss


def _gram_panels(features, *, norm, use_bf16_mxu=True, tm=512):
    """Fallback for M > 1024: (i, j, k) output panels, tm=512 (AI = tm/2)."""
    M, K = features.shape
    itemsize = features.dtype.itemsize
    cast_bf16 = bool(use_bf16_mxu) and features.dtype == jnp.float32

    mp = _round_up(M, tm)
    max_tk = _pick_max_tk(2 * tm, itemsize)
    kp, tk = _choose_k_tiling(K, max_tk)
    f = features
    if mp != M or kp != K:
        f = jnp.pad(f, ((0, mp - M), (0, kp - K)))
    k_steps = kp // tk

    kernel = functools.partial(_gram_panel_kernel, inv_norm=1.0 / float(norm),
                               cast_bf16=cast_bf16)
    # TODO(synk): exploit gram symmetry (compute only i <= j panels and mirror)
    # to halve MXU work and panel DMAs in this MXU-bound large-M regime.
    g = pl.pallas_call(
        kernel,
        out_shape=jax.ShapeDtypeStruct((mp, mp), jnp.float32),
        grid_spec=pltpu.PrefetchScalarGridSpec(
            num_scalar_prefetch=0,
            grid=(mp // tm, mp // tm, k_steps),
            in_specs=[
                _f_block_spec((tm, tk), lambda i, j, k: (i, k), k_steps),
                _f_block_spec((tm, tk), lambda i, j, k: (j, k), k_steps),
            ],
            out_specs=pl.BlockSpec((tm, tm), lambda i, j, k: (i, j)),
            scratch_shapes=[pltpu.VMEM((tm, tm), jnp.float32)]),
        compiler_params=pltpu.CompilerParams(
            dimension_semantics=("parallel", "parallel", "arbitrary")),
        cost_estimate=pl.CostEstimate(
            flops=2 * mp * mp * kp, transcendentals=0,
            bytes_accessed=2 * (mp // tm) * mp * kp * itemsize + mp * mp * 4),
    )(f, f)
    if mp != M:
        g = g[:M, :M]
    return g


def _gram_pallas(features, *, norm, target=None, use_bf16_mxu=True):
    M, _ = features.shape
    if M <= _SMALL_M_LIMIT:
        return _gram_small(features, norm=norm, target=target,
                           use_bf16_mxu=use_bf16_mxu)
    g = _gram_panels(features, norm=norm, use_bf16_mxu=use_bf16_mxu)
    if target is None:
        return g
    loss = jnp.mean((g - target.astype(jnp.float32)) ** 2)
    return g, loss


# ---------------------------------------------------------------------------
# Module-level API mirroring the PyTorch StyleLoss.
# ---------------------------------------------------------------------------
def gram_matrix(x, *, use_bf16_mxu=True):
    """x: (N, C, H, W). Returns (N*C, N*C) gram matrix divided by N*C*H*W."""
    n, c, h, w = x.shape
    feats = x.reshape(n * c, h * w)
    return _gram_pallas(feats, norm=n * c * h * w, use_bf16_mxu=use_bf16_mxu)


class StyleLoss:
    """JAX/Pallas analogue of the PyTorch StyleLoss module."""

    def __init__(self, target_feature, *, use_bf16_mxu=True):
        self._use_bf16_mxu = use_bf16_mxu
        # Target-free gram path: no dummy target, no wasted MSE epilogue.
        self.target = gram_matrix(target_feature, use_bf16_mxu=use_bf16_mxu)

    def __call__(self, x):
        n, c, h, w = x.shape
        feats = x.reshape(n * c, h * w)
        # Gram + MSE fused in one pallas_call (F streamed from HBM once).
        _, self.loss = _gram_pallas(feats, norm=n * c * h * w,
                                    target=self.target,
                                    use_bf16_mxu=self._use_bf16_mxu)
        return x  # forward returns the input unchanged


# ---------------------------------------------------------------------------
# Self-test
# ---------------------------------------------------------------------------
def _reference_gram(x, cast_bf16=True):
    n, c, h, w = x.shape
    f = x.reshape(n * c, h * w)
    if cast_bf16:
        f = f.astype(jnp.bfloat16)      # mirror the kernel's bf16 MXU path
    f = f.astype(jnp.float32)
    return (f @ f.T) / float(n * c * h * w)


if __name__ == "__main__":
    key = jax.random.PRNGKey(0)
    k_tgt, k_in = jax.random.split(key)

    # Small shapes consistent with the module: NCHW feature maps.
    N, C, H, W = 2, 4, 16, 16
    target_feature = jax.random.normal(k_tgt, (N, C, H, W), dtype=jnp.float32)
    x = jax.random.normal(k_in, (N, C, H, W), dtype=jnp.float32)

    module = StyleLoss(target_feature)
    out = module(x)
    out = jax.block_until_ready(out)
    loss = jax.block_until_ready(module.loss)

    g_kernel = jax.block_until_ready(gram_matrix(x))

    # References: tight check against a bf16-input reference (matches the
    # kernel's MXU path), loose check against the pure-f32 reference.
    g_ref = _reference_gram(x)
    t_ref = _reference_gram(target_feature)
    loss_ref = jnp.mean((g_ref - t_ref) ** 2)
    g_ref_f32 = _reference_gram(x, cast_bf16=False)

    assert out.shape == x.shape and out.dtype == x.dtype
    assert jnp.allclose(out, x)
    assert jnp.allclose(g_kernel, g_ref, rtol=1e-5, atol=1e-6)
    assert jnp.allclose(g_kernel, g_ref_f32, rtol=5e-2, atol=2e-3)
    assert jnp.allclose(loss, loss_ref, rtol=1e-4, atol=1e-7), (loss, loss_ref)

    print("KERNEL_OK")
</pallas_src>

<mosaic_0001>
module attributes {stable_mosaic.version = 11 : i64} {
  func.func @_gram_slab_kernel(%arg0: i32, %arg1: i32, %arg2: memref<8x256xf32, #tpu.memory_space<vmem>>, %arg3: memref<1x8x8xf32, #tpu.memory_space<vmem>>, %arg4: memref<8x8xf32, #tpu.memory_space<vmem>>) attributes {dimension_semantics = [#tpu.dimension_semantics<parallel>, #tpu.dimension_semantics<arbitrary>], iteration_bounds = array<i64: 1, 1>, scalar_prefetch = 0 : i64, scratch_operands = 1 : i64, tpu.core_type = #tpu.core_type<tc>, window_params = [{transform_indices = @transform_0, window_bounds = array<i64: 8, 256>}, {transform_indices = @transform_1, window_bounds = array<i64: 1, 8, 8>}]} {
    %c0_i32 = arith.constant 0 : i32
    %0 = arith.cmpi eq, %arg1, %c0_i32 : i32
    %1 = arith.extui %0 : i1 to i32
    %c0_i32_0 = arith.constant 0 : i32
    %2 = arith.cmpi ne, %1, %c0_i32_0 : i32
    scf.if %2 {
      %cst_8 = arith.constant 0.000000e+00 : f32
      %12 = vector.broadcast %cst_8 : f32 to vector<8x8xf32>
      %c0_9 = arith.constant 0 : index
      %c0_10 = arith.constant 0 : index
      %13 = vector.load %arg4[%c0_9, %c0_10] : memref<8x8xf32, #tpu.memory_space<vmem>>, vector<8x8xf32>
      tpu.vector_store %arg4[%c0_9, %c0_10], %12 {strides = array<i32>} : memref<8x8xf32, #tpu.memory_space<vmem>>, vector<8x8xf32>,
    } else {
    }
    %c0 = arith.constant 0 : index
    %c0_1 = arith.constant 0 : index
    %3 = vector.load %arg2[%c0, %c0_1] : memref<8x256xf32, #tpu.memory_space<vmem>>, vector<8x256xf32>
    %4 = arith.truncf %3 : vector<8x256xf32> to vector<8x256xbf16>
    %c0_2 = arith.constant 0 : index
    %c0_3 = arith.constant 0 : index
    %5 = vector.load %arg4[%c0_2, %c0_3] : memref<8x8xf32, #tpu.memory_space<vmem>>, vector<8x8xf32>
    %cst = arith.constant dense<0.000000e+00> : vector<8x8xf32>
    %6 = tpu.matmul %4, %4, %cst {dimension_numbers = #tpu.dot_dimension_numbers<[1], [1], [0], [0], [0, 0, 1, 0], [], []>} : vector<8x256xbf16>, vector<8x256xbf16>, vector<8x8xf32> -> vector<8x8xf32>
    %7 = arith.addf %5, %6 : vector<8x8xf32>
    %c0_4 = arith.constant 0 : index
    %c0_5 = arith.constant 0 : index
    %8 = vector.load %arg4[%c0_4, %c0_5] : memref<8x8xf32, #tpu.memory_space<vmem>>, vector<8x8xf32>
    tpu.vector_store %arg4[%c0_4, %c0_5], %7 {strides = array<i32>} : memref<8x8xf32, #tpu.memory_space<vmem>>, vector<8x8xf32>,
    %c0_i32_6 = arith.constant 0 : i32
    %9 = arith.cmpi eq, %arg1, %c0_i32_6 : i32
    %10 = arith.extui %9 : i1 to i32
    %c0_i32_7 = arith.constant 0 : i32
    %11 = arith.cmpi ne, %10, %c0_i32_7 : i32
    scf.if %11 {
      %c0_8 = arith.constant 0 : index
      %c0_9 = arith.constant 0 : index
      %12 = vector.load %arg4[%c0_8, %c0_9] : memref<8x8xf32, #tpu.memory_space<vmem>>, vector<8x8xf32>
      %cst_10 = arith.constant 4.8828125E-4 : f32
      %13 = vector.broadcast %cst_10 : f32 to vector<8x8xf32>
      %14 = arith.mulf %12, %13 : vector<8x8xf32>
      %c0_11 = arith.constant 0 : index
      %c0_12 = arith.constant 0 : index
      %c0_13 = arith.constant 0 : index
      %15 = vector.load %arg3[%c0_11, %c0_12, %c0_13] : memref<1x8x8xf32, #tpu.memory_space<vmem>>, vector<1x8x8xf32>
      %16 = vector.shape_cast %15 : vector<1x8x8xf32> to vector<8x8xf32>
      %17 = vector.shape_cast %14 : vector<8x8xf32> to vector<1x8x8xf32>
      tpu.vector_store %arg3[%c0_11, %c0_12, %c0_13], %17 {strides = array<i32>} : memref<1x8x8xf32, #tpu.memory_space<vmem>>, vector<1x8x8xf32>,
    } else {
    }
    return
  }
  func.func @transform_0(%arg0: i32, %arg1: i32) -> (i32, i32) {
    %c1_i32 = arith.constant 1 : i32
    %0 = arith.muli %arg0, %c1_i32 : i32
    %1 = arith.addi %0, %arg1 : i32
    %c0_i32 = arith.constant 0 : i32
    %c0_i32_0 = arith.constant 0 : i32
    return %c0_i32, %1 : i32, i32
  }
  func.func @transform_1(%arg0: i32, %arg1: i32) -> (i32, i32, i32) {
    %c0_i32 = arith.constant 0 : i32
    %c0_i32_0 = arith.constant 0 : i32
    %c0_i32_1 = arith.constant 0 : i32
    return %arg0, %c0_i32, %c0_i32_0 : i32, i32, i32
  }
}

</mosaic_0001>

<llo_original>
// kernel: tpu_custom_call.1
$region0: #{tpu_custom_call.1}
  #allocation0 [shape = 'u32[]', space=smem, size = 0x4, offset = 0x4, fixed_abs, tag = 'smem constant byte address 0x4 - core index']
  #allocation1 [shape = 'u32[72,128]{1,0:T(1,128)}', space=vmem, size = 0x9000, scoped, tag = 'internal scratch']
  #allocation2 [shape = 'f32[8,8]{1,0:T(8,128)}', space=vmem, size = 0x1000, scoped, tag = 'scratch operand']
  %s0 = inlined_call_operand.hbm [shape: f32[8,256], index: 0, kind: input, shape index: {}]
  %s1 = inlined_call_operand.hbm [shape: f32[1,8,8], index: 1, kind: output, shape index: {}]
  %s2 = sld [smem:[#allocation0]]
  $region26: #{tpu_custom_call.1} parent=0
    _
  %s4 = ssub.s32 1, %s2
  %s5 = scalar_select 0, %s4, %s2
  $region1: #{tpu_custom_call.1} parent=0
    #allocation3 [shape = 'u8[8192]{0}', space=vmem, size = 0x2000, scoped, tag = 'input window, operand 0, single buffered']
    #allocation4 [shape = 's32[1]{0}', space=sflag, size = 0x4, scoped, tag = 'scoped memory for tpu_custom_call.1']
    #allocation5 [shape = 's32[1]{0}', space=sflag, size = 0x4, scoped, tag = 'scoped memory for tpu_custom_call.1']
    #allocation6 [shape = 'u8[4096]{0}', space=vmem, size = 0x1000, scoped, tag = 'output window, operand 0, single buffered']
    %6 = vsyncpa [#allocation4], 0
    %7 = vsyncpa [#allocation5], 0
    // Predicated region
    $region2: #{tpu_custom_call.1} parent=1 // pred_check
      _
    $region3: #{tpu_custom_call.1} parent=1 // pred_check_branch
      %9 = sbr.rel (0) target = $region5
    $region4: #{tpu_custom_call.1} parent=1 // pred_region
      %s10 = sadd.s32 0, 0
      %s11 = smul.u32 2, %s10
      %13 = vsyncadd [#allocation4], 0
      %s14 = smul.addr %s11, 8
      %s15 = scalar_lea.hbm %s0, %s14
      %s17 = sshll.u32 %s15, 4
      %s18 = int_to_ptr.hbm [resolvable:$true] %s17
      %s19 = sshll.u32 [#allocation3], 4
      %s20 = int_to_ptr.vmem [resolvable:$true] %s19
      %22 = dma.hbm_to_vmem [thread:$0]  %s18, 256, %s20, [#allocation4]
    $region5: #{tpu_custom_call.1} parent=1 // pred_fallthru
      _
    // Predicated region
    $region6: #{tpu_custom_call.1} parent=1 // pred_check
      _
    $region7: #{tpu_custom_call.1} parent=1 // pred_check_branch
      %24 = sbr.rel (0) target = $region9
    $region8: #{tpu_custom_call.1} parent=1 // pred_region
      %26 = dma.done [#allocation4], 256
    $region9: #{tpu_custom_call.1} parent=1 // pred_fallthru
      _
    %s27 = sadd.s32 0, 0
    %s28 = smul.u32 2, %s27
    %p30 = scmp.eq.s32.totalorder 0, 0
    // Predicated region
    $region10: #{tpu_custom_call.1} parent=1 // pred_check
      %p31 = pneg %p30
    $region11: #{tpu_custom_call.1} parent=1 // pred_check_branch
      %33 = sbr.rel (%p31) target = $region13
    $region12: #{tpu_custom_call.1} parent=1 // pred_region
      %vm34 = vcmask 64512
      %35 = vst.msk [vmem:[#allocation2] sm:$0xff] %vm34, 0.0
    $region13: #{tpu_custom_call.1} parent=1 // pred_fallthru
      _
    %v36 = vld [vmem:[#allocation3] sm:$0xff]
    %v37 = vld [vmem:[#allocation3 + $0x8] sm:$0xff]
    %v38 = vpack.c.bf16 %v36, %v36
    %v39 = vpack.c.bf16 %v37, %v37
    %v40 = vld [vmem:[#allocation2] sm:$0xff]
    %41 = vmatpush.bf16.xpose.msra.mxu0 0
    %42 = vmatpush.bf16.xpose.msra.mxu0 0
    %43 = vmatpush.bf16.xpose.msra.mxu0 0
    %44 = vmatpush.bf16.xpose.msra.mxu0 0
    %45 = vmatpush.bf16.xpose.msra.mxu0 0
    %46 = vmatpush.bf16.xpose.msra.mxu0 0
    %47 = vmatpush.bf16.xpose.msra.mxu0 0
    %48 = vmatpush.bf16.xpose.msra.mxu0 %v38
    %49 = vmatmul.bf16.gmra.mxu0 %v38
    %v50 = vpop.f32.mrf.mxu0
    %v51 = vadd.f32 0.0, %v50
    %v52 = vpop.f32.mrf.mxu0
    %53 = vdwg.mxu0
    %54 = vmatpush.bf16.xpose.msra.mxu0 0
    %55 = vmatpush.bf16.xpose.msra.mxu0 0
    %56 = vmatpush.bf16.xpose.msra.mxu0 0
    %57 = vmatpush.bf16.xpose.msra.mxu0 0
    %58 = vmatpush.bf16.xpose.msra.mxu0 0
    %59 = vmatpush.bf16.xpose.msra.mxu0 0
    %60 = vmatpush.bf16.xpose.msra.mxu0 0
    %61 = vmatpush.bf16.xpose.msra.mxu0 %v39
    %62 = vmatmul.bf16.gmra.mxu0 %v39
    %v63 = vpop.f32.mrf.mxu0
    %v64 = vadd.f32 %v51, %v63
    %v65 = vpop.f32.mrf.mxu0
    %66 = vdwg.mxu0
    %v67 = vadd.f32 %v40, %v64
    %vm68 = vcmask 64512
    %69 = vst.msk [vmem:[#allocation2] sm:$0xff] %vm68, %v67
    // Predicated region
    $region14: #{tpu_custom_call.1} parent=1 // pred_check
      %p70 = pneg %p30
    $region15: #{tpu_custom_call.1} parent=1 // pred_check_branch
      %72 = sbr.rel (%p70) target = $region17
    $region16: #{tpu_custom_call.1} parent=1 // pred_region
      %v73 = vld [vmem:[#allocation2] sm:$0xff]
      %v74 = vmul.f32 %v73, 0.00048828125
      %75 = vst.msk [vmem:[#allocation6] sm:$0xff] %vm68, %v74
    $region17: #{tpu_custom_call.1} parent=1 // pred_fallthru
      _
    // Predicated region
    $region18: #{tpu_custom_call.1} parent=1 // pred_check
      _
    $region19: #{tpu_custom_call.1} parent=1 // pred_check_branch
      %77 = sbr.rel (0) target = $region21
    $region20: #{tpu_custom_call.1} parent=1 // pred_region
      %79 = vsyncadd [#allocation5], 0
      %s81 = sshll.u32 [#allocation6], 4
      %s82 = int_to_ptr.vmem [resolvable:$true] %s81
      %s83 = sshll.u32 %s1, 4
      %s84 = int_to_ptr.hbm [resolvable:$true] %s83
      %86 = dma.vmem_to_hbm [thread:$0]  %s82, 128, %s84, [#allocation5]
    $region21: #{tpu_custom_call.1} parent=1 // pred_fallthru
      _
    // Predicated region
    $region22: #{tpu_custom_call.1} parent=1 // pred_check
      _
    $region23: #{tpu_custom_call.1} parent=1 // pred_check_branch
      %88 = sbr.rel (0) target = $region25
    $region24: #{tpu_custom_call.1} parent=1 // pred_region
      %90 = dma.done [#allocation5], 128
    $region25: #{tpu_custom_call.1} parent=1 // pred_fallthru
      _
    %91 = vsyncpa [#allocation4], 1
    %92 = vsyncpa [#allocation5], 1

</llo_original>
